<compile_context>
chip_gen: v7x
topology: tpu7x:2x2x1
jax: 0.10.0
libtpu: 0.0.40
codegen_flags: <defaults>
</compile_context>

<pallas_src>
import functools

import jax
import jax.numpy as jnp
from jax import lax
from jax.experimental import pallas as pl
from jax.experimental.pallas import tpu as pltpu


def _cdiv(a: int, b: int) -> int:
    return -(-a // b)


def _round_up(x: int, m: int) -> int:
    return ((x + m - 1) // m) * m


_EW_DTYPE = None


def _elementwise_dtype():
    """bf16 bias+tanh on v6e/v7x (bf16 VPU/EUP); f32 on v5e and older."""
    global _EW_DTYPE
    if _EW_DTYPE is None:
        try:
            kind = jax.devices()[0].device_kind.lower()
        except Exception:
            kind = ""
        if any(v in kind for v in ("v2", "v3", "v4", "v5")):
            _EW_DTYPE = jnp.float32
        else:
            _EW_DTYPE = jnp.bfloat16
    return _EW_DTYPE


def _physical_vmem_bytes() -> int:
    try:
        return int(pltpu.get_tpu_info().vmem_capacity_bytes)
    except Exception:
        return 64 * 1024 * 1024  # conservative default: v7x per-TensorCore VMEM


def prepare_params(w1, b1, w2, b2, w3, b3, matmul_dtype=jnp.bfloat16):
    """One-time weight formatting — call once, outside the per-step path.

    Weights are [in, out]; biases are [out].  Hidden dims are zero-padded to
    multiples of 128 (lane-dense MXU tiles); D_in and D_out stay unpadded so
    activations need no wrapper-side padding/slicing.  Zero-padded weight
    columns and bias lanes keep padded lanes at tanh(0) = 0, so they
    contribute nothing downstream.
    """
    d_in, h1 = w1.shape
    h2 = w2.shape[1]
    d_out = w3.shape[1]
    h1p = _round_up(h1, 128)
    h2p = _round_up(h2, 128)

    def pad2(a, rows, cols, dtype):
        a = jnp.asarray(a, jnp.float32)
        a = jnp.pad(a, ((0, rows - a.shape[0]), (0, cols - a.shape[1])))
        return a.astype(dtype)

    w1p = pad2(w1, d_in, h1p, matmul_dtype)
    w2p = pad2(w2, h1p, h2p, matmul_dtype)
    w3p = pad2(w3, h2p, d_out, matmul_dtype)
    b1p = pad2(jnp.reshape(b1, (1, -1)), 1, h1p, jnp.float32)
    b2p = pad2(jnp.reshape(b2, (1, -1)), 1, h2p, jnp.float32)
    b3p = pad2(jnp.reshape(b3, (1, -1)), 1, d_out, jnp.float32)
    return (w1p, b1p, w2p, b2p, w3p, b3p)


def _three_layer_kernel(x_ref, w1_ref, b1_ref, w2_ref, b2_ref, w3_ref, b3_ref,
                        o_ref, *, n_sub, sub_rows, ew_dtype):
    mm_dtype = w1_ref.dtype  # bf16 MXU operands

    def process(row0):
        # Cast the activation tile in-kernel (no wrapper-side pass).
        xs = x_ref[pl.ds(row0, sub_rows), :].astype(mm_dtype)
        # Layer 1: bf16 MXU matmul, f32 accumulate; bias+tanh in ew_dtype.
        h = jnp.dot(xs, w1_ref[...], preferred_element_type=jnp.float32)
        h = jnp.tanh((h + b1_ref[...]).astype(ew_dtype))
        # Layer 2.
        h = jnp.dot(h.astype(mm_dtype), w2_ref[...],
                    preferred_element_type=jnp.float32)
        h = jnp.tanh((h + b2_ref[...]).astype(ew_dtype))
        # Layer 3.
        h = jnp.dot(h.astype(mm_dtype), w3_ref[...],
                    preferred_element_type=jnp.float32)
        h = jnp.tanh((h + b3_ref[...]).astype(ew_dtype))
        o_ref[pl.ds(row0, sub_rows), :] = h.astype(o_ref.dtype)

    if n_sub == 1:
        process(0)
    else:
        # Unrolled so layer-k matmul of sub-block j overlaps tanh of j-1.
        def body(j, carry):
            process(pl.multiple_of(j * sub_rows, 8))
            return carry

        lax.fori_loop(0, n_sub, body, 0, unroll=True)


@functools.partial(jax.jit, static_argnames=("tb", "single_buffer_weights"))
def _forward(x, w1, b1, w2, b2, w3, b3, *, tb, single_buffer_weights):
    B, D_in = x.shape
    H1p = w1.shape[1]
    H2p = w2.shape[1]
    D_out = w3.shape[1]
    out_dtype = x.dtype
    ew_dtype = _elementwise_dtype()

    # ---- batch tile: balanced tiles, no batch padding (ragged last tile) ----
    n_tiles = max(1, _cdiv(B, max(8, tb)))
    TB = min(_round_up(_cdiv(B, n_tiles), 8), _round_up(B, 8))

    # ---- VMEM budget: tiles + resident weights under ~85% of physical ----
    phys = _physical_vmem_bytes()
    cap = int(phys * 0.85)
    w_bufs = 1 if single_buffer_weights else 2
    w_bytes = 2 * w_bufs * (D_in * H1p + H1p * H2p + H2p * D_out)   # bf16
    b_bytes = 4 * w_bufs * (H1p + H2p + D_out)                      # f32

    def vmem_estimate(tb_rows):
        tiles = 2 * tb_rows * (D_in + D_out) * x.dtype.itemsize  # dbl-buffered io
        interm = 2 * tb_rows * max(H1p, H2p) * 4                 # live intermediates
        return tiles + interm + w_bytes + b_bytes

    # TODO(synk): fall back to a K-tiled grid when the resident weights alone
    # exceed the VMEM budget (very large H); not needed at these sizes.
    while TB > 8 and vmem_estimate(TB) + (4 << 20) > cap:
        TB = max(8, _round_up(TB // 2, 8))

    vmem_limit = int(min(cap, max(32 << 20, vmem_estimate(TB) + (8 << 20))))

    grid = (_cdiv(B, TB),)
    n_sub = 2 if TB % 16 == 0 else 1
    sub_rows = TB // n_sub

    kernel = functools.partial(_three_layer_kernel, n_sub=n_sub,
                               sub_rows=sub_rows, ew_dtype=ew_dtype)

    def resident(shape):
        idx = lambda i: (0,) * len(shape)
        if single_buffer_weights:
            # Grid-invariant operands: no point double-buffering them.
            return pl.BlockSpec(shape, idx, pipeline_mode=pl.Buffered(1))
        return pl.BlockSpec(shape, idx)

    return pl.pallas_call(
        kernel,
        out_shape=jax.ShapeDtypeStruct((B, D_out), out_dtype),
        grid=grid,
        in_specs=[
            pl.BlockSpec((TB, D_in), lambda i: (i, 0)),   # batch-tiled activations
            resident((D_in, H1p)),                        # w1
            resident((1, H1p)),                           # b1
            resident((H1p, H2p)),                         # w2
            resident((1, H2p)),                           # b2
            resident((H2p, D_out)),                       # w3
            resident((1, D_out)),                         # b3
        ],
        out_specs=pl.BlockSpec((TB, D_out), lambda i: (i, 0)),
        compiler_params=pltpu.CompilerParams(
            dimension_semantics=("parallel",),
            vmem_limit_bytes=vmem_limit,
        ),
    )(x, w1, b1, w2, b2, w3, b3)


_SINGLE_BUFFER_OK = None


def three_layer_net(x, params, *, tb=512):
    """Fused ThreeLayerNet forward.  `params` come from prepare_params()."""
    global _SINGLE_BUFFER_OK
    args = (x,) + tuple(params)
    if _SINGLE_BUFFER_OK is not False:
        try:
            out = _forward(*args, tb=tb, single_buffer_weights=True)
            if _SINGLE_BUFFER_OK is None:
                out = jax.block_until_ready(out)
                _SINGLE_BUFFER_OK = True
            return out
        except Exception:
            # Fallback if this JAX build rejects pl.Buffered(1) on the
            # top-level pallas_call pipeline.
            _SINGLE_BUFFER_OK = False
    return _forward(*args, tb=tb, single_buffer_weights=False)


def reference_f32(x, w1, b1, w2, b2, w3, b3):
    h = jnp.tanh(x @ w1 + b1)
    h = jnp.tanh(h @ w2 + b2)
    h = jnp.tanh(h @ w3 + b3)
    return h


if __name__ == "__main__":
    # Small shapes consistent with ThreeLayerNet(D_in, H, D_out).
    B, D_in, H, D_out = 8, 16, 32, 8

    key = jax.random.PRNGKey(0)
    ks = jax.random.split(key, 8)

    x = jax.random.normal(ks[0], (B, D_in), dtype=jnp.float32)

    # Deterministic parameter init (uniform, PyTorch-Linear-like scale).
    def init_linear(kw, kb, fan_in, fan_out):
        bound = 1.0 / jnp.sqrt(jnp.float32(fan_in))
        w = jax.random.uniform(kw, (fan_in, fan_out), jnp.float32, -bound, bound)
        b = jax.random.uniform(kb, (fan_out,), jnp.float32, -bound, bound)
        return w, b

    w1, b1 = init_linear(ks[1], ks[2], D_in, H)
    w2, b2 = init_linear(ks[3], ks[4], H, H)
    w3, b3 = init_linear(ks[5], ks[6], H, D_out)

    # One-time weight formatting (hoisted out of the per-call path).
    params = jax.block_until_ready(prepare_params(w1, b1, w2, b2, w3, b3))

    # Numerics contract: bf16 MXU operands (+ bf16 tanh on v6e/v7x) vs f32 ref.
    atol = 2e-2 if _elementwise_dtype() == jnp.float32 else 5e-2

    # --- primary check: tiny batch, single grid step, n_sub == 1 ---
    out = jax.block_until_ready(three_layer_net(x, params))
    assert out.shape == (B, D_out) and out.dtype == x.dtype
    ref = reference_f32(x, w1, b1, w2, b2, w3, b3)
    assert jnp.allclose(out, ref, atol=atol, rtol=0.0), \
        float(jnp.max(jnp.abs(out - ref)))

    # --- secondary check: multi-tile grid, ragged last tile, sub-block loop ---
    B2 = 40
    x2 = jax.random.normal(ks[7], (B2, D_in), dtype=jnp.float32)
    out2 = jax.block_until_ready(three_layer_net(x2, params, tb=16))
    assert out2.shape == (B2, D_out)
    ref2 = reference_f32(x2, w1, b1, w2, b2, w3, b3)
    assert jnp.allclose(out2, ref2, atol=atol, rtol=0.0), \
        float(jnp.max(jnp.abs(out2 - ref2)))

    print("KERNEL_OK")
</pallas_src>

<mosaic_0001>
module attributes {stable_mosaic.version = 11 : i64} {
  func.func @_three_layer_kernel(%arg0: i32, %arg1: memref<8x16xf32, #tpu.memory_space<vmem>>, %arg2: memref<16x128xbf16, #tpu.memory_space<vmem>>, %arg3: memref<1x128xf32, #tpu.memory_space<vmem>>, %arg4: memref<128x128xbf16, #tpu.memory_space<vmem>>, %arg5: memref<1x128xf32, #tpu.memory_space<vmem>>, %arg6: memref<128x8xbf16, #tpu.memory_space<vmem>>, %arg7: memref<1x8xf32, #tpu.memory_space<vmem>>, %arg8: memref<8x8xf32, #tpu.memory_space<vmem>>) attributes {dimension_semantics = [#tpu.dimension_semantics<parallel>], iteration_bounds = array<i64: 1>, scalar_prefetch = 0 : i64, scratch_operands = 0 : i64, tpu.core_type = #tpu.core_type<tc>, window_params = [{transform_indices = @transform_0, window_bounds = array<i64: 8, 16>}, {pipeline_mode = #tpu.pipeline_mode<synchronous>, transform_indices = @transform_1, window_bounds = array<i64: 16, 128>}, {pipeline_mode = #tpu.pipeline_mode<synchronous>, transform_indices = @transform_2, window_bounds = array<i64: 1, 128>}, {pipeline_mode = #tpu.pipeline_mode<synchronous>, transform_indices = @transform_3, window_bounds = array<i64: 128, 128>}, {pipeline_mode = #tpu.pipeline_mode<synchronous>, transform_indices = @transform_4, window_bounds = array<i64: 1, 128>}, {pipeline_mode = #tpu.pipeline_mode<synchronous>, transform_indices = @transform_5, window_bounds = array<i64: 128, 8>}, {pipeline_mode = #tpu.pipeline_mode<synchronous>, transform_indices = @transform_6, window_bounds = array<i64: 1, 8>}, {transform_indices = @transform_7, window_bounds = array<i64: 8, 8>}]} {
    %c0 = arith.constant 0 : index
    %c0_0 = arith.constant 0 : index
    %0 = vector.load %arg1[%c0, %c0_0] : memref<8x16xf32, #tpu.memory_space<vmem>>, vector<8x16xf32>
    %1 = arith.truncf %0 : vector<8x16xf32> to vector<8x16xbf16>
    %c0_1 = arith.constant 0 : index
    %c0_2 = arith.constant 0 : index
    %2 = vector.load %arg2[%c0_1, %c0_2] : memref<16x128xbf16, #tpu.memory_space<vmem>>, vector<16x128xbf16>
    %cst = arith.constant dense<0.000000e+00> : vector<8x128xf32>
    %3 = tpu.matmul %1, %2, %cst {dimension_numbers = #tpu.dot_dimension_numbers<[1], [0], [0], [1], [0, 0, 1, 1], [], []>} : vector<8x16xbf16>, vector<16x128xbf16>, vector<8x128xf32> -> vector<8x128xf32>
    %c0_3 = arith.constant 0 : index
    %c0_4 = arith.constant 0 : index
    %4 = vector.load %arg3[%c0_3, %c0_4] : memref<1x128xf32, #tpu.memory_space<vmem>>, vector<1x128xf32>
    %5 = vector.broadcast %4 : vector<1x128xf32> to vector<8x128xf32>
    %6 = arith.addf %3, %5 : vector<8x128xf32>
    %7 = arith.truncf %6 : vector<8x128xf32> to vector<8x128xbf16>
    %8 = math.tanh %7 : vector<8x128xbf16>
    %c0_5 = arith.constant 0 : index
    %c0_6 = arith.constant 0 : index
    %9 = vector.load %arg4[%c0_5, %c0_6] : memref<128x128xbf16, #tpu.memory_space<vmem>>, vector<128x128xbf16>
    %cst_7 = arith.constant dense<0.000000e+00> : vector<8x128xf32>
    %10 = tpu.matmul %8, %9, %cst_7 {dimension_numbers = #tpu.dot_dimension_numbers<[1], [0], [0], [1], [0, 0, 1, 1], [], []>} : vector<8x128xbf16>, vector<128x128xbf16>, vector<8x128xf32> -> vector<8x128xf32>
    %c0_8 = arith.constant 0 : index
    %c0_9 = arith.constant 0 : index
    %11 = vector.load %arg5[%c0_8, %c0_9] : memref<1x128xf32, #tpu.memory_space<vmem>>, vector<1x128xf32>
    %12 = vector.broadcast %11 : vector<1x128xf32> to vector<8x128xf32>
    %13 = arith.addf %10, %12 : vector<8x128xf32>
    %14 = arith.truncf %13 : vector<8x128xf32> to vector<8x128xbf16>
    %15 = math.tanh %14 : vector<8x128xbf16>
    %c0_10 = arith.constant 0 : index
    %c0_11 = arith.constant 0 : index
    %16 = vector.load %arg6[%c0_10, %c0_11] : memref<128x8xbf16, #tpu.memory_space<vmem>>, vector<128x8xbf16>
    %cst_12 = arith.constant dense<0.000000e+00> : vector<8x8xf32>
    %17 = tpu.matmul %15, %16, %cst_12 {dimension_numbers = #tpu.dot_dimension_numbers<[1], [0], [0], [1], [0, 0, 1, 1], [], []>} : vector<8x128xbf16>, vector<128x8xbf16>, vector<8x8xf32> -> vector<8x8xf32>
    %c0_13 = arith.constant 0 : index
    %c0_14 = arith.constant 0 : index
    %18 = vector.load %arg7[%c0_13, %c0_14] : memref<1x8xf32, #tpu.memory_space<vmem>>, vector<1x8xf32>
    %19 = vector.broadcast %18 : vector<1x8xf32> to vector<8x8xf32>
    %20 = arith.addf %17, %19 : vector<8x8xf32>
    %21 = arith.truncf %20 : vector<8x8xf32> to vector<8x8xbf16>
    %22 = math.tanh %21 : vector<8x8xbf16>
    %23 = arith.extf %22 : vector<8x8xbf16> to vector<8x8xf32>
    %c0_15 = arith.constant 0 : index
    %c0_16 = arith.constant 0 : index
    %24 = vector.load %arg8[%c0_15, %c0_16] : memref<8x8xf32, #tpu.memory_space<vmem>>, vector<8x8xf32>
    tpu.vector_store %arg8[%c0_15, %c0_16], %23 {strides = array<i32>} : memref<8x8xf32, #tpu.memory_space<vmem>>, vector<8x8xf32>,
    return
  }
  func.func @transform_0(%arg0: i32) -> (i32, i32) {
    %c0_i32 = arith.constant 0 : i32
    %c0_i32_0 = arith.constant 0 : i32
    return %arg0, %c0_i32 : i32, i32
  }
  func.func @transform_1(%arg0: i32) -> (i32, i32) {
    %c0_i32 = arith.constant 0 : i32
    %c0_i32_0 = arith.constant 0 : i32
    %c0_i32_1 = arith.constant 0 : i32
    return %c0_i32, %c0_i32_0 : i32, i32
  }
  func.func @transform_2(%arg0: i32) -> (i32, i32) {
    %c0_i32 = arith.constant 0 : i32
    %c0_i32_0 = arith.constant 0 : i32
    %c0_i32_1 = arith.constant 0 : i32
    return %c0_i32, %c0_i32_0 : i32, i32
  }
  func.func @transform_3(%arg0: i32) -> (i32, i32) {
    %c0_i32 = arith.constant 0 : i32
    %c0_i32_0 = arith.constant 0 : i32
    %c0_i32_1 = arith.constant 0 : i32
    return %c0_i32, %c0_i32_0 : i32, i32
  }
  func.func @transform_4(%arg0: i32) -> (i32, i32) {
    %c0_i32 = arith.constant 0 : i32
    %c0_i32_0 = arith.constant 0 : i32
    %c0_i32_1 = arith.constant 0 : i32
    return %c0_i32, %c0_i32_0 : i32, i32
  }
  func.func @transform_5(%arg0: i32) -> (i32, i32) {
    %c0_i32 = arith.constant 0 : i32
    %c0_i32_0 = arith.constant 0 : i32
    %c0_i32_1 = arith.constant 0 : i32
    return %c0_i32, %c0_i32_0 : i32, i32
  }
  func.func @transform_6(%arg0: i32) -> (i32, i32) {
    %c0_i32 = arith.constant 0 : i32
    %c0_i32_0 = arith.constant 0 : i32
    %c0_i32_1 = arith.constant 0 : i32
    return %c0_i32, %c0_i32_0 : i32, i32
  }
  func.func @transform_7(%arg0: i32) -> (i32, i32) {
    %c0_i32 = arith.constant 0 : i32
    %c0_i32_0 = arith.constant 0 : i32
    return %arg0, %c0_i32 : i32, i32
  }
}

module attributes {stable_mosaic.version = 11 : i64} {
  func.func @_three_layer_kernel(%arg0: i32, %arg1: memref<8x16xf32, #tpu.memory_space<vmem>>, %arg2: memref<16x128xbf16, #tpu.memory_space<vmem>>, %arg3: memref<1x128xf32, #tpu.memory_space<vmem>>, %arg4: memref<128x128xbf16, #tpu.memory_space<vmem>>, %arg5: memref<1x128xf32, #tpu.memory_space<vmem>>, %arg6: memref<128x8xbf16, #tpu.memory_space<vmem>>, %arg7: memref<1x8xf32, #tpu.memory_space<vmem>>, %arg8: memref<8x8xf32, #tpu.memory_space<vmem>>) attributes {dimension_semantics = [#tpu.dimension_semantics<parallel>], iteration_bounds = array<i64: 1>, scalar_prefetch = 0 : i64, scratch_operands = 0 : i64, tpu.core_type = #tpu.core_type<tc>, window_params = [{transform_indices = @transform_0, window_bounds = array<i64: 8, 16>}, {pipeline_mode = #tpu.pipeline_mode<synchronous>, transform_indices = @transform_1, window_bounds = array<i64: 16, 128>}, {pipeline_mode = #tpu.pipeline_mode<synchronous>, transform_indices = @transform_2, window_bounds = array<i64: 1, 128>}, {pipeline_mode = #tpu.pipeline_mode<synchronous>, transform_indices = @transform_3, window_bounds = array<i64: 128, 128>}, {pipeline_mode = #tpu.pipeline_mode<synchronous>, transform_indices = @transform_4, window_bounds = array<i64: 1, 128>}, {pipeline_mode = #tpu.pipeline_mode<synchronous>, transform_indices = @transform_5, window_bounds = array<i64: 128, 8>}, {pipeline_mode = #tpu.pipeline_mode<synchronous>, transform_indices = @transform_6, window_bounds = array<i64: 1, 8>}, {transform_indices = @transform_7, window_bounds = array<i64: 8, 8>}]} {
    %c0 = arith.constant 0 : index
    %c0_0 = arith.constant 0 : index
    %0 = vector.load %arg1[%c0, %c0_0] : memref<8x16xf32, #tpu.memory_space<vmem>>, vector<8x16xf32>
    %1 = arith.truncf %0 : vector<8x16xf32> to vector<8x16xbf16>
    %c0_1 = arith.constant 0 : index
    %c0_2 = arith.constant 0 : index
    %2 = vector.load %arg2[%c0_1, %c0_2] : memref<16x128xbf16, #tpu.memory_space<vmem>>, vector<16x128xbf16>
    %cst = arith.constant dense<0.000000e+00> : vector<8x128xf32>
    %3 = tpu.matmul %1, %2, %cst {dimension_numbers = #tpu.dot_dimension_numbers<[1], [0], [0], [1], [0, 0, 1, 1], [], []>} : vector<8x16xbf16>, vector<16x128xbf16>, vector<8x128xf32> -> vector<8x128xf32>
    %c0_3 = arith.constant 0 : index
    %c0_4 = arith.constant 0 : index
    %4 = vector.load %arg3[%c0_3, %c0_4] : memref<1x128xf32, #tpu.memory_space<vmem>>, vector<1x128xf32>
    %5 = vector.broadcast %4 : vector<1x128xf32> to vector<8x128xf32>
    %6 = arith.addf %3, %5 : vector<8x128xf32>
    %7 = arith.truncf %6 : vector<8x128xf32> to vector<8x128xbf16>
    %8 = math.tanh %7 : vector<8x128xbf16>
    %c0_5 = arith.constant 0 : index
    %c0_6 = arith.constant 0 : index
    %9 = vector.load %arg4[%c0_5, %c0_6] : memref<128x128xbf16, #tpu.memory_space<vmem>>, vector<128x128xbf16>
    %cst_7 = arith.constant dense<0.000000e+00> : vector<8x128xf32>
    %10 = tpu.matmul %8, %9, %cst_7 {dimension_numbers = #tpu.dot_dimension_numbers<[1], [0], [0], [1], [0, 0, 1, 1], [], []>} : vector<8x128xbf16>, vector<128x128xbf16>, vector<8x128xf32> -> vector<8x128xf32>
    %c0_8 = arith.constant 0 : index
    %c0_9 = arith.constant 0 : index
    %11 = vector.load %arg5[%c0_8, %c0_9] : memref<1x128xf32, #tpu.memory_space<vmem>>, vector<1x128xf32>
    %12 = vector.broadcast %11 : vector<1x128xf32> to vector<8x128xf32>
    %13 = arith.addf %10, %12 : vector<8x128xf32>
    %14 = arith.truncf %13 : vector<8x128xf32> to vector<8x128xbf16>
    %15 = math.tanh %14 : vector<8x128xbf16>
    %c0_10 = arith.constant 0 : index
    %c0_11 = arith.constant 0 : index
    %16 = vector.load %arg6[%c0_10, %c0_11] : memref<128x8xbf16, #tpu.memory_space<vmem>>, vector<128x8xbf16>
    %cst_12 = arith.constant dense<0.000000e+00> : vector<8x8xf32>
    %17 = tpu.matmul %15, %16, %cst_12 {dimension_numbers = #tpu.dot_dimension_numbers<[1], [0], [0], [1], [0, 0, 1, 1], [], []>} : vector<8x128xbf16>, vector<128x8xbf16>, vector<8x8xf32> -> vector<8x8xf32>
    %c0_13 = arith.constant 0 : index
    %c0_14 = arith.constant 0 : index
    %18 = vector.load %arg7[%c0_13, %c0_14] : memref<1x8xf32, #tpu.memory_space<vmem>>, vector<1x8xf32>
    %19 = vector.broadcast %18 : vector<1x8xf32> to vector<8x8xf32>
    %20 = arith.addf %17, %19 : vector<8x8xf32>
    %21 = arith.truncf %20 : vector<8x8xf32> to vector<8x8xbf16>
    %22 = math.tanh %21 : vector<8x8xbf16>
    %23 = arith.extf %22 : vector<8x8xbf16> to vector<8x8xf32>
    %c0_15 = arith.constant 0 : index
    %c0_16 = arith.constant 0 : index
    %24 = vector.load %arg8[%c0_15, %c0_16] : memref<8x8xf32, #tpu.memory_space<vmem>>, vector<8x8xf32>
    tpu.vector_store %arg8[%c0_15, %c0_16], %23 {strides = array<i32>} : memref<8x8xf32, #tpu.memory_space<vmem>>, vector<8x8xf32>,
    return
  }
  func.func @transform_0(%arg0: i32) -> (i32, i32) {
    %c0_i32 = arith.constant 0 : i32
    %c0_i32_0 = arith.constant 0 : i32
    return %arg0, %c0_i32 : i32, i32
  }
  func.func @transform_1(%arg0: i32) -> (i32, i32) {
    %c0_i32 = arith.constant 0 : i32
    %c0_i32_0 = arith.constant 0 : i32
    %c0_i32_1 = arith.constant 0 : i32
    return %c0_i32, %c0_i32_0 : i32, i32
  }
  func.func @transform_2(%arg0: i32) -> (i32, i32) {
    %c0_i32 = arith.constant 0 : i32
    %c0_i32_0 = arith.constant 0 : i32
    %c0_i32_1 = arith.constant 0 : i32
    return %c0_i32, %c0_i32_0 : i32, i32
  }
  func.func @transform_3(%arg0: i32) -> (i32, i32) {
    %c0_i32 = arith.constant 0 : i32
    %c0_i32_0 = arith.constant 0 : i32
    %c0_i32_1 = arith.constant 0 : i32
    return %c0_i32, %c0_i32_0 : i32, i32
  }
  func.func @transform_4(%arg0: i32) -> (i32, i32) {
    %c0_i32 = arith.constant 0 : i32
    %c0_i32_0 = arith.constant 0 : i32
    %c0_i32_1 = arith.constant 0 : i32
    return %c0_i32, %c0_i32_0 : i32, i32
  }
  func.func @transform_5(%arg0: i32) -> (i32, i32) {
    %c0_i32 = arith.constant 0 : i32
    %c0_i32_0 = arith.constant 0 : i32
    %c0_i32_1 = arith.constant 0 : i32
    return %c0_i32, %c0_i32_0 : i32, i32
  }
  func.func @transform_6(%arg0: i32) -> (i32, i32) {
    %c0_i32 = arith.constant 0 : i32
    %c0_i32_0 = arith.constant 0 : i32
    %c0_i32_1 = arith.constant 0 : i32
    return %c0_i32, %c0_i32_0 : i32, i32
  }
  func.func @transform_7(%arg0: i32) -> (i32, i32) {
    %c0_i32 = arith.constant 0 : i32
    %c0_i32_0 = arith.constant 0 : i32
    return %arg0, %c0_i32 : i32, i32
  }
}

</mosaic_0001>

<llo_original>
// kernel: _forward.1
$region0: #{_forward.1}
  #allocation0 [shape = 'u32[]', space=smem, size = 0x4, offset = 0x4, fixed_abs, tag = 'smem constant byte address 0x4 - core index']
  #allocation1 [shape = 'u32[144,128]{1,0:T(1,128)}', space=vmem, size = 0x12000, scoped, tag = 'internal scratch']
  %s0 = inlined_call_operand.vmem [shape: f32[8,16], index: 0, kind: input, shape index: {}]
  %s1 = inlined_call_operand.hbm [shape: bf16[16,128], index: 1, kind: input, shape index: {}]
  %s2 = inlined_call_operand.vmem [shape: f32[1,128], index: 2, kind: input, shape index: {}]
  %s3 = inlined_call_operand.vmem [shape: bf16[128,128], index: 3, kind: input, shape index: {}]
  %s4 = inlined_call_operand.vmem [shape: f32[1,128], index: 4, kind: input, shape index: {}]
  %s5 = inlined_call_operand.vmem [shape: bf16[128,8], index: 5, kind: input, shape index: {}]
  %s6 = inlined_call_operand.vmem [shape: f32[1,8], index: 6, kind: input, shape index: {}]
  %s7 = inlined_call_operand.hbm [shape: f32[8,8], index: 7, kind: output, shape index: {}]
  %s8 = sld [smem:[#allocation0]]
  $region42: #{_forward.1} parent=0
    _
  %s10 = ssub.s32 1, %s8
  %s11 = scalar_select 0, %s10, %s8
  $region1: #{_forward.1} parent=0
    #allocation2 [shape = 'u8[4096]{0}', space=vmem, size = 0x1000, scoped, tag = 'input window, operand 1, single buffered']
    #allocation3 [shape = 's32[1]{0}', space=sflag, size = 0x4, scoped, tag = 'scoped memory for _forward.1']
    #allocation4 [shape = 's32[1]{0}', space=sflag, size = 0x4, scoped, tag = 'scoped memory for _forward.1']
    #allocation5 [shape = 'u8[4096]{0}', space=vmem, size = 0x1000, scoped, tag = 'output window, operand 0, single buffered']
    %12 = vsyncpa [#allocation3], 0
    %13 = vsyncpa [#allocation4], 0
    // Predicated region
    $region2: #{_forward.1} parent=1 // pred_check
      _
    $region3: #{_forward.1} parent=1 // pred_check_branch
      %15 = sbr.rel (0) target = $region5
    $region4: #{_forward.1} parent=1 // pred_region
      _
    $region5: #{_forward.1} parent=1 // pred_fallthru
      _
    // Predicated region
    $region6: #{_forward.1} parent=1 // pred_check
      _
    $region7: #{_forward.1} parent=1 // pred_check_branch
      %17 = sbr.rel (0) target = $region9
    $region8: #{_forward.1} parent=1 // pred_region
      %s19 = ssub.s32 128, 128
      %20 = vsyncadd [#allocation3], %s19
      %s21 = sshll.u32 [#allocation2], 4
      %s22 = int_to_ptr.vmem [resolvable:$true] %s21
      %27 = dma.hbm_to_vmem [thread:$0]  %s1, 128, %s22, [#allocation3], 64, 64, 4
    $region9: #{_forward.1} parent=1 // pred_fallthru
      _
    // Predicated region
    $region10: #{_forward.1} parent=1 // pred_check
      _
    $region11: #{_forward.1} parent=1 // pred_check_branch
      %29 = sbr.rel (0) target = $region13
    $region12: #{_forward.1} parent=1 // pred_region
      _
    $region13: #{_forward.1} parent=1 // pred_fallthru
      _
    // Predicated region
    $region14: #{_forward.1} parent=1 // pred_check
      _
    $region15: #{_forward.1} parent=1 // pred_check_branch
      %31 = sbr.rel (0) target = $region17
    $region16: #{_forward.1} parent=1 // pred_region
      _
    $region17: #{_forward.1} parent=1 // pred_fallthru
      _
    // Predicated region
    $region18: #{_forward.1} parent=1 // pred_check
      _
    $region19: #{_forward.1} parent=1 // pred_check_branch
      %33 = sbr.rel (0) target = $region21
    $region20: #{_forward.1} parent=1 // pred_region
      _
    $region21: #{_forward.1} parent=1 // pred_fallthru
      _
    // Predicated region
    $region22: #{_forward.1} parent=1 // pred_check
      _
    $region23: #{_forward.1} parent=1 // pred_check_branch
      %35 = sbr.rel (0) target = $region25
    $region24: #{_forward.1} parent=1 // pred_region
      _
    $region25: #{_forward.1} parent=1 // pred_fallthru
      _
    // Predicated region
    $region26: #{_forward.1} parent=1 // pred_check
      _
    $region27: #{_forward.1} parent=1 // pred_check_branch
      %37 = sbr.rel (0) target = $region29
    $region28: #{_forward.1} parent=1 // pred_region
      _
    $region29: #{_forward.1} parent=1 // pred_fallthru
      _
    // Predicated region
    $region30: #{_forward.1} parent=1 // pred_check
      _
    $region31: #{_forward.1} parent=1 // pred_check_branch
      %39 = sbr.rel (0) target = $region33
    $region32: #{_forward.1} parent=1 // pred_region
      %40 = dma.done [#allocation3], 128
    $region33: #{_forward.1} parent=1 // pred_fallthru
      _
    %v42 = vld [vmem:[%s0] sm:$0xff]
    %v43 = vpack.c.bf16 %v42, %v42
    %v44 = vld [vmem:[#allocation2] sm:$0xf]
    %v45 = vld [vmem:[#allocation2 + $0x4] sm:$0xf]
    %v46 = vld [vmem:[%s2] sm:$0x1]
    %v48 = vlaneseq
    %v49 = vshrl.u32 %v48, 7
    %v50 = vsub.s32 0, %v49
    %v51 = vrot.slane %v46, %v50
    %v55 = vunpack.c.l.b16 %v44
    %v56 = vunpack.c.l.b16 %v45
    %v57 = vpack.c.b16 %v56, %v55
    %vm59 = vcmask 130048
    %v61 = vsel %vm59, %v43, 0
    %63 = vmatprep.subr.bf16.mxu0 0
    %64 = vmatpush1.bf16.msra.mxu0 %v57
    %65 = vmatprep.subr.bf16.mxu0 0
    %66 = vmatpush1.bf16.msra.mxu0 0
    %67 = vmatprep.subr.bf16.mxu0 0
    %68 = vmatpush1.bf16.msra.mxu0 0
    %69 = vmatprep.subr.bf16.mxu0 0
    %70 = vmatpush1.bf16.msra.mxu0 0
    %71 = vmatprep.subr.bf16.mxu0 0
    %72 = vmatpush1.bf16.msra.mxu0 0
    %73 = vmatprep.subr.bf16.mxu0 0
    %74 = vmatpush1.bf16.msra.mxu0 0
    %75 = vmatprep.subr.bf16.mxu0 0
    %76 = vmatpush1.bf16.msra.mxu0 0
    %77 = vmatprep.subr.bf16.mxu0 0
    %78 = vmatpush1.bf16.msra.mxu0 0
    %79 = vmatprep.subr.bf16.mxu0 0
    %80 = vmatpush1.bf16.msra.mxu0 0
    %81 = vmatprep.subr.bf16.mxu0 0
    %82 = vmatpush1.bf16.msra.mxu0 0
    %83 = vmatprep.subr.bf16.mxu0 0
    %84 = vmatpush1.bf16.msra.mxu0 0
    %85 = vmatprep.subr.bf16.mxu0 0
    %86 = vmatpush1.bf16.msra.mxu0 0
    %87 = vmatprep.subr.bf16.mxu0 0
    %88 = vmatpush1.bf16.msra.mxu0 0
    %89 = vmatprep.subr.bf16.mxu0 0
    %90 = vmatpush1.bf16.msra.mxu0 0
    %91 = vmatprep.subr.bf16.mxu0 0
    %92 = vmatpush1.bf16.msra.mxu0 0
    %93 = vmatprep.subr.bf16.mxu0 0
    %94 = vmatpush1.bf16.msra.mxu0 0
    %95 = vmatprep.mubr.bf16.mxu0 0
    %96 = vmatmul.mubr.bf16.gmra.mrb[0].mxu0 %v61
    %v97 = vpop.f32.mrb[0].mxu0
    %v98 = vadd.f32 %v51, %v97
    %v99 = vpop.f32.mrb[0].mxu0
    %v100 = vpop.f32.mrb[0].mxu0
    %v101 = vpop.f32.mrb[0].mxu0
    %102 = vdwg.mxu0
    %v103 = vpack.c.bf16 %v98, %v98
    %v104 = vtanh.bf16.pop %v103
    %v105 = vld [vmem:[%s3] sm:$0xf]
    %v106 = vld [vmem:[%s3 + $0x4] sm:$0xf]
    %v107 = vld [vmem:[%s3 + $0x8] sm:$0xf]
    %v108 = vld [vmem:[%s3 + $0xc] sm:$0xf]
    %v109 = vld [vmem:[%s3 + $0x10] sm:$0xf]
    %v110 = vld [vmem:[%s3 + $0x14] sm:$0xf]
    %v111 = vld [vmem:[%s3 + $0x18] sm:$0xf]
    %v112 = vld [vmem:[%s3 + $0x1c] sm:$0xf]
    %v113 = vld [vmem:[%s3 + $0x20] sm:$0xf]
    %v114 = vld [vmem:[%s3 + $0x24] sm:$0xf]
    %v115 = vld [vmem:[%s3 + $0x28] sm:$0xf]
    %v116 = vld [vmem:[%s3 + $0x2c] sm:$0xf]
    %v117 = vld [vmem:[%s3 + $0x30] sm:$0xf]
    %v118 = vld [vmem:[%s3 + $0x34] sm:$0xf]
    %v119 = vld [vmem:[%s3 + $0x38] sm:$0xf]
    %v120 = vld [vmem:[%s3 + $0x3c] sm:$0xf]
    %v121 = vld [vmem:[%s4] sm:$0x1]
    %v123 = vlaneseq
    %v124 = vshrl.u32 %v123, 7
    %v125 = vsub.s32 0, %v124
    %v126 = vrot.slane %v121, %v125
    %v144 = vunpack.c.l.b16 %v105
    %v145 = vunpack.c.l.b16 %v106
    %v146 = vunpack.c.l.b16 %v107
    %v147 = vunpack.c.l.b16 %v108
    %v148 = vunpack.c.l.b16 %v109
    %v149 = vunpack.c.l.b16 %v110
    %v150 = vunpack.c.l.b16 %v111
    %v151 = vunpack.c.l.b16 %v112
    %v152 = vunpack.c.l.b16 %v113
    %v153 = vunpack.c.l.b16 %v114
    %v154 = vunpack.c.l.b16 %v115
    %v155 = vunpack.c.l.b16 %v116
    %v156 = vunpack.c.l.b16 %v117
    %v157 = vunpack.c.l.b16 %v118
    %v158 = vunpack.c.l.b16 %v119
    %v159 = vunpack.c.l.b16 %v120
    %v160 = vpack.c.b16 %v145, %v144
    %v161 = vpack.c.b16 %v147, %v146
    %v162 = vpack.c.b16 %v149, %v148
    %v163 = vpack.c.b16 %v151, %v150
    %v164 = vpack.c.b16 %v153, %v152
    %v165 = vpack.c.b16 %v155, %v154
    %v166 = vpack.c.b16 %v157, %v156
    %v167 = vpack.c.b16 %v159, %v158
    %176 = vmatprep.subr.bf16.mxu0 0
    %177 = vmatpush1.bf16.msra.mxu0 %v160
    %178 = vmatprep.subr.bf16.mxu0 0
    %179 = vmatpush1.bf16.msra.mxu0 %v161
    %180 = vmatprep.subr.bf16.mxu0 0
    %181 = vmatpush1.bf16.msra.mxu0 %v162
    %182 = vmatprep.subr.bf16.mxu0 0
    %183 = vmatpush1.bf16.msra.mxu0 %v163
    %184 = vmatprep.subr.bf16.mxu0 0
    %185 = vmatpush1.bf16.msra.mxu0 %v164
    %186 = vmatprep.subr.bf16.mxu0 0
    %187 = vmatpush1.bf16.msra.mxu0 %v165
    %188 = vmatprep.subr.bf16.mxu0 0
    %189 = vmatpush1.bf16.msra.mxu0 %v166
    %190 = vmatprep.subr.bf16.mxu0 0
    %191 = vmatpush1.bf16.msra.mxu0 %v167
    %192 = vmatprep.subr.bf16.mxu0 0
    %193 = vmatpush1.bf16.msra.mxu0 0
    %194 = vmatprep.subr.bf16.mxu0 0
    %195 = vmatpush1.bf16.msra.mxu0 0
    %196 = vmatprep.subr.bf16.mxu0 0
    %197 = vmatpush1.bf16.msra.mxu0 0
    %198 = vmatprep.subr.bf16.mxu0 0
    %199 = vmatpush1.bf16.msra.mxu0 0
    %200 = vmatprep.subr.bf16.mxu0 0
    %201 = vmatpush1.bf16.msra.mxu0 0
    %202 = vmatprep.subr.bf16.mxu0 0
    %203 = vmatpush1.bf16.msra.mxu0 0
    %204 = vmatprep.subr.bf16.mxu0 0
    %205 = vmatpush1.bf16.msra.mxu0 0
    %206 = vmatprep.subr.bf16.mxu0 0
    %207 = vmatpush1.bf16.msra.mxu0 0
    %208 = vmatprep.mubr.bf16.mxu0 0
    %209 = vmatmul.mubr.bf16.gmra.mrb[0].mxu0 %v104
    %v210 = vpop.f32.mrb[0].mxu0
    %v211 = vadd.f32 %v126, %v210
    %v212 = vpop.f32.mrb[0].mxu0
    %v213 = vpop.f32.mrb[0].mxu0
    %v214 = vpop.f32.mrb[0].mxu0
    %215 = vdwg.mxu0
    %v216 = vpack.c.bf16 %v211, %v211
    %v217 = vtanh.bf16.pop %v216
    %v218 = vld [vmem:[%s5] sm:$0xf]
    %v219 = vld [vmem:[%s5 + $0x4] sm:$0xf]
    %v220 = vld [vmem:[%s5 + $0x8] sm:$0xf]
    %v221 = vld [vmem:[%s5 + $0xc] sm:$0xf]
    %v222 = vld [vmem:[%s5 + $0x10] sm:$0xf]
    %v223 = vld [vmem:[%s5 + $0x14] sm:$0xf]
    %v224 = vld [vmem:[%s5 + $0x18] sm:$0xf]
    %v225 = vld [vmem:[%s5 + $0x1c] sm:$0xf]
    %v226 = vld [vmem:[%s5 + $0x20] sm:$0xf]
    %v227 = vld [vmem:[%s5 + $0x24] sm:$0xf]
    %v228 = vld [vmem:[%s5 + $0x28] sm:$0xf]
    %v229 = vld [vmem:[%s5 + $0x2c] sm:$0xf]
    %v230 = vld [vmem:[%s5 + $0x30] sm:$0xf]
    %v231 = vld [vmem:[%s5 + $0x34] sm:$0xf]
    %v232 = vld [vmem:[%s5 + $0x38] sm:$0xf]
    %v233 = vld [vmem:[%s5 + $0x3c] sm:$0xf]
    %v234 = vld [vmem:[%s6] sm:$0x1]
    %v236 = vlaneseq
    %v237 = vshrl.u32 %v236, 7
    %v238 = vsub.s32 0, %v237
    %v239 = vrot.slane %v234, %v238
    %v257 = vunpack.c.l.b16 %v218
    %v258 = vunpack.c.l.b16 %v219
    %v259 = vunpack.c.l.b16 %v220
    %v260 = vunpack.c.l.b16 %v221
    %v261 = vunpack.c.l.b16 %v222
    %v262 = vunpack.c.l.b16 %v223
    %v263 = vunpack.c.l.b16 %v224
    %v264 = vunpack.c.l.b16 %v225
    %v265 = vunpack.c.l.b16 %v226
    %v266 = vunpack.c.l.b16 %v227
    %v267 = vunpack.c.l.b16 %v228
    %v268 = vunpack.c.l.b16 %v229
    %v269 = vunpack.c.l.b16 %v230
    %v270 = vunpack.c.l.b16 %v231
    %v271 = vunpack.c.l.b16 %v232
    %v272 = vunpack.c.l.b16 %v233
    %v273 = vpack.c.b16 %v258, %v257
    %v274 = vpack.c.b16 %v260, %v259
    %v275 = vpack.c.b16 %v262, %v261
    %v276 = vpack.c.b16 %v264, %v263
    %v277 = vpack.c.b16 %v266, %v265
    %v278 = vpack.c.b16 %v268, %v267
    %v279 = vpack.c.b16 %v270, %v269
    %v280 = vpack.c.b16 %v272, %v271
    %289 = vmatprep.subr.bf16.mxu0 0
    %290 = vmatpush1.bf16.msra.mxu0 %v273
    %291 = vmatprep.subr.bf16.mxu0 0
    %292 = vmatpush1.bf16.msra.mxu0 %v274
    %293 = vmatprep.subr.bf16.mxu0 0
    %294 = vmatpush1.bf16.msra.mxu0 %v275
    %295 = vmatprep.subr.bf16.mxu0 0
    %296 = vmatpush1.bf16.msra.mxu0 %v276
    %297 = vmatprep.subr.bf16.mxu0 0
    %298 = vmatpush1.bf16.msra.mxu0 %v277
    %299 = vmatprep.subr.bf16.mxu0 0
    %300 = vmatpush1.bf16.msra.mxu0 %v278
    %301 = vmatprep.subr.bf16.mxu0 0
    %302 = vmatpush1.bf16.msra.mxu0 %v279
    %303 = vmatprep.subr.bf16.mxu0 0
    %304 = vmatpush1.bf16.msra.mxu0 %v280
    %305 = vmatprep.subr.bf16.mxu0 0
    %306 = vmatpush1.bf16.msra.mxu0 0
    %307 = vmatprep.subr.bf16.mxu0 0
    %308 = vmatpush1.bf16.msra.mxu0 0
    %309 = vmatprep.subr.bf16.mxu0 0
    %310 = vmatpush1.bf16.msra.mxu0 0
    %311 = vmatprep.subr.bf16.mxu0 0
    %312 = vmatpush1.bf16.msra.mxu0 0
    %313 = vmatprep.subr.bf16.mxu0 0
    %314 = vmatpush1.bf16.msra.mxu0 0
    %315 = vmatprep.subr.bf16.mxu0 0
    %316 = vmatpush1.bf16.msra.mxu0 0
    %317 = vmatprep.subr.bf16.mxu0 0
    %318 = vmatpush1.bf16.msra.mxu0 0
    %319 = vmatprep.subr.bf16.mxu0 0
    %320 = vmatpush1.bf16.msra.mxu0 0
    %321 = vmatprep.mubr.bf16.mxu0 0
    %322 = vmatmul.mubr.bf16.gmra.mrb[0].mxu0 %v217
    %v323 = vpop.f32.mrb[0].mxu0
    %v324 = vadd.f32 %v239, %v323
    %v325 = vpop.f32.mrb[0].mxu0
    %v326 = vpop.f32.mrb[0].mxu0
    %v327 = vpop.f32.mrb[0].mxu0
    %328 = vdwg.mxu0
    %v329 = vpack.c.bf16 %v324, %v324
    %v330 = vtanh.bf16.pop %v329
    %v331 = vunpack.c.l.bf16 %v330
    %vm332 = vcmask 64512
    %333 = vst.msk [vmem:[#allocation5] sm:$0xff] %vm332, %v331
    // Predicated region
    $region34: #{_forward.1} parent=1 // pred_check
      _
    $region35: #{_forward.1} parent=1 // pred_check_branch
      %335 = sbr.rel (0) target = $region37
    $region36: #{_forward.1} parent=1 // pred_region
      %s337 = ssub.s32 128, 128
      %338 = vsyncadd [#allocation4], %s337
      %s340 = sshll.u32 [#allocation5], 4
      %s341 = int_to_ptr.vmem [resolvable:$true] %s340
      %343 = dma.vmem_to_hbm [thread:$0]  %s341, 128, %s7, [#allocation4]
    $region37: #{_forward.1} parent=1 // pred_fallthru
      _
    // Predicated region
    $region38: #{_forward.1} parent=1 // pred_check
      _
    $region39: #{_forward.1} parent=1 // pred_check_branch
      %345 = sbr.rel (0) target = $region41
    $region40: #{_forward.1} parent=1 // pred_region
      %346 = dma.done [#allocation4], 128
    $region41: #{_forward.1} parent=1 // pred_fallthru
      _
    %347 = vsyncpa [#allocation3], 1
    %348 = vsyncpa [#allocation4], 1

// kernel: _forward.1
$region0: #{_forward.1}
  #allocation0 [shape = 'u32[]', space=smem, size = 0x4, offset = 0x4, fixed_abs, tag = 'smem constant byte address 0x4 - core index']
  #allocation1 [shape = 'u32[144,128]{1,0:T(1,128)}', space=vmem, size = 0x12000, scoped, tag = 'internal scratch']
  %s0 = inlined_call_operand.vmem [shape: f32[8,16], index: 0, kind: input, shape index: {}]
  %s1 = inlined_call_operand.hbm [shape: bf16[16,128], index: 1, kind: input, shape index: {}]
  %s2 = inlined_call_operand.vmem [shape: f32[1,128], index: 2, kind: input, shape index: {}]
  %s3 = inlined_call_operand.vmem [shape: bf16[128,128], index: 3, kind: input, shape index: {}]
  %s4 = inlined_call_operand.vmem [shape: f32[1,128], index: 4, kind: input, shape index: {}]
  %s5 = inlined_call_operand.vmem [shape: bf16[128,8], index: 5, kind: input, shape index: {}]
  %s6 = inlined_call_operand.vmem [shape: f32[1,8], index: 6, kind: input, shape index: {}]
  %s7 = inlined_call_operand.hbm [shape: f32[8,8], index: 7, kind: output, shape index: {}]
  %s8 = sld [smem:[#allocation0]]
  $region42: #{_forward.1} parent=0
    _
  %s10 = ssub.s32 1, %s8
  %s11 = scalar_select 0, %s10, %s8
  $region1: #{_forward.1} parent=0
    #allocation2 [shape = 'u8[4096]{0}', space=vmem, size = 0x1000, scoped, tag = 'input window, operand 1, single buffered']
    #allocation3 [shape = 's32[1]{0}', space=sflag, size = 0x4, scoped, tag = 'scoped memory for _forward.1']
    #allocation4 [shape = 's32[1]{0}', space=sflag, size = 0x4, scoped, tag = 'scoped memory for _forward.1']
    #allocation5 [shape = 'u8[4096]{0}', space=vmem, size = 0x1000, scoped, tag = 'output window, operand 0, single buffered']
    %12 = vsyncpa [#allocation3], 0
    %13 = vsyncpa [#allocation4], 0
    // Predicated region
    $region2: #{_forward.1} parent=1 // pred_check
      _
    $region3: #{_forward.1} parent=1 // pred_check_branch
      %15 = sbr.rel (0) target = $region5
    $region4: #{_forward.1} parent=1 // pred_region
      _
    $region5: #{_forward.1} parent=1 // pred_fallthru
      _
    // Predicated region
    $region6: #{_forward.1} parent=1 // pred_check
      _
    $region7: #{_forward.1} parent=1 // pred_check_branch
      %17 = sbr.rel (0) target = $region9
    $region8: #{_forward.1} parent=1 // pred_region
      %s19 = ssub.s32 128, 128
      %20 = vsyncadd [#allocation3], %s19
      %s21 = sshll.u32 [#allocation2], 4
      %s22 = int_to_ptr.vmem [resolvable:$true] %s21
      %27 = dma.hbm_to_vmem [thread:$0]  %s1, 128, %s22, [#allocation3], 64, 64, 4
    $region9: #{_forward.1} parent=1 // pred_fallthru
      _
    // Predicated region
    $region10: #{_forward.1} parent=1 // pred_check
      _
    $region11: #{_forward.1} parent=1 // pred_check_branch
      %29 = sbr.rel (0) target = $region13
    $region12: #{_forward.1} parent=1 // pred_region
      _
    $region13: #{_forward.1} parent=1 // pred_fallthru
      _
    // Predicated region
    $region14: #{_forward.1} parent=1 // pred_check
      _
    $region15: #{_forward.1} parent=1 // pred_check_branch
      %31 = sbr.rel (0) target = $region17
    $region16: #{_forward.1} parent=1 // pred_region
      _
    $region17: #{_forward.1} parent=1 // pred_fallthru
      _
    // Predicated region
    $region18: #{_forward.1} parent=1 // pred_check
      _
    $region19: #{_forward.1} parent=1 // pred_check_branch
      %33 = sbr.rel (0) target = $region21
    $region20: #{_forward.1} parent=1 // pred_region
      _
    $region21: #{_forward.1} parent=1 // pred_fallthru
      _
    // Predicated region
    $region22: #{_forward.1} parent=1 // pred_check
      _
    $region23: #{_forward.1} parent=1 // pred_check_branch
      %35 = sbr.rel (0) target = $region25
    $region24: #{_forward.1} parent=1 // pred_region
      _
    $region25: #{_forward.1} parent=1 // pred_fallthru
      _
    // Predicated region
    $region26: #{_forward.1} parent=1 // pred_check
      _
    $region27: #{_forward.1} parent=1 // pred_check_branch
      %37 = sbr.rel (0) target = $region29
    $region28: #{_forward.1} parent=1 // pred_region
      _
    $region29: #{_forward.1} parent=1 // pred_fallthru
      _
    // Predicated region
    $region30: #{_forward.1} parent=1 // pred_check
      _
    $region31: #{_forward.1} parent=1 // pred_check_branch
      %39 = sbr.rel (0) target = $region33
    $region32: #{_forward.1} parent=1 // pred_region
      %40 = dma.done [#allocation3], 128
    $region33: #{_forward.1} parent=1 // pred_fallthru
      _
    %v42 = vld [vmem:[%s0] sm:$0xff]
    %v43 = vpack.c.bf16 %v42, %v42
    %v44 = vld [vmem:[#allocation2] sm:$0xf]
    %v45 = vld [vmem:[#allocation2 + $0x4] sm:$0xf]
    %v46 = vld [vmem:[%s2] sm:$0x1]
    %v48 = vlaneseq
    %v49 = vshrl.u32 %v48, 7
    %v50 = vsub.s32 0, %v49
    %v51 = vrot.slane %v46, %v50
    %v55 = vunpack.c.l.b16 %v44
    %v56 = vunpack.c.l.b16 %v45
    %v57 = vpack.c.b16 %v56, %v55
    %vm59 = vcmask 130048
    %v61 = vsel %vm59, %v43, 0
    %63 = vmatprep.subr.bf16.mxu0 0
    %64 = vmatpush1.bf16.msra.mxu0 %v57
    %65 = vmatprep.subr.bf16.mxu0 0
    %66 = vmatpush1.bf16.msra.mxu0 0
    %67 = vmatprep.subr.bf16.mxu0 0
    %68 = vmatpush1.bf16.msra.mxu0 0
    %69 = vmatprep.subr.bf16.mxu0 0
    %70 = vmatpush1.bf16.msra.mxu0 0
    %71 = vmatprep.subr.bf16.mxu0 0
    %72 = vmatpush1.bf16.msra.mxu0 0
    %73 = vmatprep.subr.bf16.mxu0 0
    %74 = vmatpush1.bf16.msra.mxu0 0
    %75 = vmatprep.subr.bf16.mxu0 0
    %76 = vmatpush1.bf16.msra.mxu0 0
    %77 = vmatprep.subr.bf16.mxu0 0
    %78 = vmatpush1.bf16.msra.mxu0 0
    %79 = vmatprep.subr.bf16.mxu0 0
    %80 = vmatpush1.bf16.msra.mxu0 0
    %81 = vmatprep.subr.bf16.mxu0 0
    %82 = vmatpush1.bf16.msra.mxu0 0
    %83 = vmatprep.subr.bf16.mxu0 0
    %84 = vmatpush1.bf16.msra.mxu0 0
    %85 = vmatprep.subr.bf16.mxu0 0
    %86 = vmatpush1.bf16.msra.mxu0 0
    %87 = vmatprep.subr.bf16.mxu0 0
    %88 = vmatpush1.bf16.msra.mxu0 0
    %89 = vmatprep.subr.bf16.mxu0 0
    %90 = vmatpush1.bf16.msra.mxu0 0
    %91 = vmatprep.subr.bf16.mxu0 0
    %92 = vmatpush1.bf16.msra.mxu0 0
    %93 = vmatprep.subr.bf16.mxu0 0
    %94 = vmatpush1.bf16.msra.mxu0 0
    %95 = vmatprep.mubr.bf16.mxu0 0
    %96 = vmatmul.mubr.bf16.gmra.mrb[0].mxu0 %v61
    %v97 = vpop.f32.mrb[0].mxu0
    %v98 = vadd.f32 %v51, %v97
    %v99 = vpop.f32.mrb[0].mxu0
    %v100 = vpop.f32.mrb[0].mxu0
    %v101 = vpop.f32.mrb[0].mxu0
    %102 = vdwg.mxu0
    %v103 = vpack.c.bf16 %v98, %v98
    %v104 = vtanh.bf16.pop %v103
    %v105 = vld [vmem:[%s3] sm:$0xf]
    %v106 = vld [vmem:[%s3 + $0x4] sm:$0xf]
    %v107 = vld [vmem:[%s3 + $0x8] sm:$0xf]
    %v108 = vld [vmem:[%s3 + $0xc] sm:$0xf]
    %v109 = vld [vmem:[%s3 + $0x10] sm:$0xf]
    %v110 = vld [vmem:[%s3 + $0x14] sm:$0xf]
    %v111 = vld [vmem:[%s3 + $0x18] sm:$0xf]
    %v112 = vld [vmem:[%s3 + $0x1c] sm:$0xf]
    %v113 = vld [vmem:[%s3 + $0x20] sm:$0xf]
    %v114 = vld [vmem:[%s3 + $0x24] sm:$0xf]
    %v115 = vld [vmem:[%s3 + $0x28] sm:$0xf]
    %v116 = vld [vmem:[%s3 + $0x2c] sm:$0xf]
    %v117 = vld [vmem:[%s3 + $0x30] sm:$0xf]
    %v118 = vld [vmem:[%s3 + $0x34] sm:$0xf]
    %v119 = vld [vmem:[%s3 + $0x38] sm:$0xf]
    %v120 = vld [vmem:[%s3 + $0x3c] sm:$0xf]
    %v121 = vld [vmem:[%s4] sm:$0x1]
    %v123 = vlaneseq
    %v124 = vshrl.u32 %v123, 7
    %v125 = vsub.s32 0, %v124
    %v126 = vrot.slane %v121, %v125
    %v144 = vunpack.c.l.b16 %v105
    %v145 = vunpack.c.l.b16 %v106
    %v146 = vunpack.c.l.b16 %v107
    %v147 = vunpack.c.l.b16 %v108
    %v148 = vunpack.c.l.b16 %v109
    %v149 = vunpack.c.l.b16 %v110
    %v150 = vunpack.c.l.b16 %v111
    %v151 = vunpack.c.l.b16 %v112
    %v152 = vunpack.c.l.b16 %v113
    %v153 = vunpack.c.l.b16 %v114
    %v154 = vunpack.c.l.b16 %v115
    %v155 = vunpack.c.l.b16 %v116
    %v156 = vunpack.c.l.b16 %v117
    %v157 = vunpack.c.l.b16 %v118
    %v158 = vunpack.c.l.b16 %v119
    %v159 = vunpack.c.l.b16 %v120
    %v160 = vpack.c.b16 %v145, %v144
    %v161 = vpack.c.b16 %v147, %v146
    %v162 = vpack.c.b16 %v149, %v148
    %v163 = vpack.c.b16 %v151, %v150
    %v164 = vpack.c.b16 %v153, %v152
    %v165 = vpack.c.b16 %v155, %v154
    %v166 = vpack.c.b16 %v157, %v156
    %v167 = vpack.c.b16 %v159, %v158
    %176 = vmatprep.subr.bf16.mxu0 0
    %177 = vmatpush1.bf16.msra.mxu0 %v160
    %178 = vmatprep.subr.bf16.mxu0 0
    %179 = vmatpush1.bf16.msra.mxu0 %v161
    %180 = vmatprep.subr.bf16.mxu0 0
    %181 = vmatpush1.bf16.msra.mxu0 %v162
    %182 = vmatprep.subr.bf16.mxu0 0
    %183 = vmatpush1.bf16.msra.mxu0 %v163
    %184 = vmatprep.subr.bf16.mxu0 0
    %185 = vmatpush1.bf16.msra.mxu0 %v164
    %186 = vmatprep.subr.bf16.mxu0 0
    %187 = vmatpush1.bf16.msra.mxu0 %v165
    %188 = vmatprep.subr.bf16.mxu0 0
    %189 = vmatpush1.bf16.msra.mxu0 %v166
    %190 = vmatprep.subr.bf16.mxu0 0
    %191 = vmatpush1.bf16.msra.mxu0 %v167
    %192 = vmatprep.subr.bf16.mxu0 0
    %193 = vmatpush1.bf16.msra.mxu0 0
    %194 = vmatprep.subr.bf16.mxu0 0
    %195 = vmatpush1.bf16.msra.mxu0 0
    %196 = vmatprep.subr.bf16.mxu0 0
    %197 = vmatpush1.bf16.msra.mxu0 0
    %198 = vmatprep.subr.bf16.mxu0 0
    %199 = vmatpush1.bf16.msra.mxu0 0
    %200 = vmatprep.subr.bf16.mxu0 0
    %201 = vmatpush1.bf16.msra.mxu0 0
    %202 = vmatprep.subr.bf16.mxu0 0
    %203 = vmatpush1.bf16.msra.mxu0 0
    %204 = vmatprep.subr.bf16.mxu0 0
    %205 = vmatpush1.bf16.msra.mxu0 0
    %206 = vmatprep.subr.bf16.mxu0 0
    %207 = vmatpush1.bf16.msra.mxu0 0
    %208 = vmatprep.mubr.bf16.mxu0 0
    %209 = vmatmul.mubr.bf16.gmra.mrb[0].mxu0 %v104
    %v210 = vpop.f32.mrb[0].mxu0
    %v211 = vadd.f32 %v126, %v210
    %v212 = vpop.f32.mrb[0].mxu0
    %v213 = vpop.f32.mrb[0].mxu0
    %v214 = vpop.f32.mrb[0].mxu0
    %215 = vdwg.mxu0
    %v216 = vpack.c.bf16 %v211, %v211
    %v217 = vtanh.bf16.pop %v216
    %v218 = vld [vmem:[%s5] sm:$0xf]
    %v219 = vld [vmem:[%s5 + $0x4] sm:$0xf]
    %v220 = vld [vmem:[%s5 + $0x8] sm:$0xf]
    %v221 = vld [vmem:[%s5 + $0xc] sm:$0xf]
    %v222 = vld [vmem:[%s5 + $0x10] sm:$0xf]
    %v223 = vld [vmem:[%s5 + $0x14] sm:$0xf]
    %v224 = vld [vmem:[%s5 + $0x18] sm:$0xf]
    %v225 = vld [vmem:[%s5 + $0x1c] sm:$0xf]
    %v226 = vld [vmem:[%s5 + $0x20] sm:$0xf]
    %v227 = vld [vmem:[%s5 + $0x24] sm:$0xf]
    %v228 = vld [vmem:[%s5 + $0x28] sm:$0xf]
    %v229 = vld [vmem:[%s5 + $0x2c] sm:$0xf]
    %v230 = vld [vmem:[%s5 + $0x30] sm:$0xf]
    %v231 = vld [vmem:[%s5 + $0x34] sm:$0xf]
    %v232 = vld [vmem:[%s5 + $0x38] sm:$0xf]
    %v233 = vld [vmem:[%s5 + $0x3c] sm:$0xf]
    %v234 = vld [vmem:[%s6] sm:$0x1]
    %v236 = vlaneseq
    %v237 = vshrl.u32 %v236, 7
    %v238 = vsub.s32 0, %v237
    %v239 = vrot.slane %v234, %v238
    %v257 = vunpack.c.l.b16 %v218
    %v258 = vunpack.c.l.b16 %v219
    %v259 = vunpack.c.l.b16 %v220
    %v260 = vunpack.c.l.b16 %v221
    %v261 = vunpack.c.l.b16 %v222
    %v262 = vunpack.c.l.b16 %v223
    %v263 = vunpack.c.l.b16 %v224
    %v264 = vunpack.c.l.b16 %v225
    %v265 = vunpack.c.l.b16 %v226
    %v266 = vunpack.c.l.b16 %v227
    %v267 = vunpack.c.l.b16 %v228
    %v268 = vunpack.c.l.b16 %v229
    %v269 = vunpack.c.l.b16 %v230
    %v270 = vunpack.c.l.b16 %v231
    %v271 = vunpack.c.l.b16 %v232
    %v272 = vunpack.c.l.b16 %v233
    %v273 = vpack.c.b16 %v258, %v257
    %v274 = vpack.c.b16 %v260, %v259
    %v275 = vpack.c.b16 %v262, %v261
    %v276 = vpack.c.b16 %v264, %v263
    %v277 = vpack.c.b16 %v266, %v265
    %v278 = vpack.c.b16 %v268, %v267
    %v279 = vpack.c.b16 %v270, %v269
    %v280 = vpack.c.b16 %v272, %v271
    %289 = vmatprep.subr.bf16.mxu0 0
    %290 = vmatpush1.bf16.msra.mxu0 %v273
    %291 = vmatprep.subr.bf16.mxu0 0
    %292 = vmatpush1.bf16.msra.mxu0 %v274
    %293 = vmatprep.subr.bf16.mxu0 0
    %294 = vmatpush1.bf16.msra.mxu0 %v275
    %295 = vmatprep.subr.bf16.mxu0 0
    %296 = vmatpush1.bf16.msra.mxu0 %v276
    %297 = vmatprep.subr.bf16.mxu0 0
    %298 = vmatpush1.bf16.msra.mxu0 %v277
    %299 = vmatprep.subr.bf16.mxu0 0
    %300 = vmatpush1.bf16.msra.mxu0 %v278
    %301 = vmatprep.subr.bf16.mxu0 0
    %302 = vmatpush1.bf16.msra.mxu0 %v279
    %303 = vmatprep.subr.bf16.mxu0 0
    %304 = vmatpush1.bf16.msra.mxu0 %v280
    %305 = vmatprep.subr.bf16.mxu0 0
    %306 = vmatpush1.bf16.msra.mxu0 0
    %307 = vmatprep.subr.bf16.mxu0 0
    %308 = vmatpush1.bf16.msra.mxu0 0
    %309 = vmatprep.subr.bf16.mxu0 0
    %310 = vmatpush1.bf16.msra.mxu0 0
    %311 = vmatprep.subr.bf16.mxu0 0
    %312 = vmatpush1.bf16.msra.mxu0 0
    %313 = vmatprep.subr.bf16.mxu0 0
    %314 = vmatpush1.bf16.msra.mxu0 0
    %315 = vmatprep.subr.bf16.mxu0 0
    %316 = vmatpush1.bf16.msra.mxu0 0
    %317 = vmatprep.subr.bf16.mxu0 0
    %318 = vmatpush1.bf16.msra.mxu0 0
    %319 = vmatprep.subr.bf16.mxu0 0
    %320 = vmatpush1.bf16.msra.mxu0 0
    %321 = vmatprep.mubr.bf16.mxu0 0
    %322 = vmatmul.mubr.bf16.gmra.mrb[0].mxu0 %v217
    %v323 = vpop.f32.mrb[0].mxu0
    %v324 = vadd.f32 %v239, %v323
    %v325 = vpop.f32.mrb[0].mxu0
    %v326 = vpop.f32.mrb[0].mxu0
    %v327 = vpop.f32.mrb[0].mxu0
    %328 = vdwg.mxu0
    %v329 = vpack.c.bf16 %v324, %v324
    %v330 = vtanh.bf16.pop %v329
    %v331 = vunpack.c.l.bf16 %v330
    %vm332 = vcmask 64512
    %333 = vst.msk [vmem:[#allocation5] sm:$0xff] %vm332, %v331
    // Predicated region
    $region34: #{_forward.1} parent=1 // pred_check
      _
    $region35: #{_forward.1} parent=1 // pred_check_branch
      %335 = sbr.rel (0) target = $region37
    $region36: #{_forward.1} parent=1 // pred_region
      %s337 = ssub.s32 128, 128
      %338 = vsyncadd [#allocation4], %s337
      %s340 = sshll.u32 [#allocation5], 4
      %s341 = int_to_ptr.vmem [resolvable:$true] %s340
      %343 = dma.vmem_to_hbm [thread:$0]  %s341, 128, %s7, [#allocation4]
    $region37: #{_forward.1} parent=1 // pred_fallthru
      _
    // Predicated region
    $region38: #{_forward.1} parent=1 // pred_check
      _
    $region39: #{_forward.1} parent=1 // pred_check_branch
      %345 = sbr.rel (0) target = $region41
    $region40: #{_forward.1} parent=1 // pred_region
      %346 = dma.done [#allocation4], 128
    $region41: #{_forward.1} parent=1 // pred_fallthru
      _
    %347 = vsyncpa [#allocation3], 1
    %348 = vsyncpa [#allocation4], 1

</llo_original>
